<compile_context>
chip_gen: v5e
topology: v5e:2x2
jax: 0.10.0
libtpu: 0.0.40
codegen_flags: <defaults>
</compile_context>

<pallas_src>
import jax
import jax.numpy as jnp
from jax.experimental import pallas as pl
from jax.experimental.pallas import tpu as pltpu

INPUT_SIZE = 112
HIDDEN = 128
BN_EPS = 1e-5
TM = 1024                 # batch-tile rows (per triplet stream) per grid step
MIN_TM = 16               # bf16 sublane-packing granularity
OUT_DTYPE = jnp.bfloat16  # bf16 outputs: halves output HBM writes
# NOTE: bf16 weights + bf16 activations + bf16 output deviate slightly from
# the fp32 PyTorch reference (fine for inference; tolerance below absorbs it).


def _round_up(x, m):
    return ((x + m - 1) // m) * m


def _cdiv(a, b):
    return (a + b - 1) // b


# ----------------------------- Pallas kernel --------------------------------
def encoder_kernel(a_ref, p_ref, n_ref,
                   w1_ref, b1_ref, w2_ref, b2_ref, w3_ref, b3_ref,
                   oa_ref, op_ref, on_ref):
    """Shared-weight 3-layer MLP applied to anchor / positive / negative tiles."""

    def enc(x_ref, o_ref):
        # layer 1: fc1 + bn1 (folded) + relu   (dropout == identity at inference)
        x = x_ref[...].astype(jnp.bfloat16)                               # (tm, 112)
        h = jnp.dot(x, w1_ref[...], preferred_element_type=jnp.float32)   # f32 acc
        h = jnp.maximum(h + b1_ref[...], 0.0)

        # layer 2: fc2 + bn2 (folded) + relu
        h = jnp.dot(h.astype(jnp.bfloat16), w2_ref[...],
                    preferred_element_type=jnp.float32)
        h = jnp.maximum(h + b2_ref[...], 0.0)

        # layer 3: fc3 + bn3 (folded), no activation
        h = jnp.dot(h.astype(jnp.bfloat16), w3_ref[...],
                    preferred_element_type=jnp.float32)
        h = h + b3_ref[...]

        o_ref[...] = h.astype(o_ref.dtype)

    enc(a_ref, oa_ref)
    enc(p_ref, op_ref)
    enc(n_ref, on_ref)


def siamese_encoder_pallas(anchor, positive, negative, fused_params, *, tm=TM):
    """One pallas_call over the triplet: shared VMEM-resident weights,
    three activation streams tiled over the batch."""
    w1, b1, w2, b2, w3, b3 = fused_params
    M = anchor.shape[0]

    # --- tile selection: minimize pad waste, keep bf16-friendly multiples of 16,
    #     and guarantee >= 2 grid steps when possible so v7x's 2nd TC gets work.
    n_steps = max(_cdiv(M, tm), 1)
    if n_steps < 2 and M >= 2 * MIN_TM:
        n_steps = 2
    tm_eff = _round_up(_cdiv(M, n_steps), MIN_TM)
    m_pad = n_steps * tm_eff

    def maybe_pad(x):
        # Boundary-only pad (no-op when M is already a multiple of tm_eff).
        if m_pad != M:
            return jnp.pad(x, ((0, m_pad - M), (0, 0)))
        return x

    a = maybe_pad(anchor)
    p = maybe_pad(positive)
    n = maybe_pad(negative)

    # activations: batch-tiled; 112 is the full last dim so no lane pad needed
    act_spec = pl.BlockSpec((tm_eff, INPUT_SIZE), lambda i: (i, 0))
    out_spec = pl.BlockSpec((tm_eff, HIDDEN), lambda i: (i, 0))
    # constant index_map -> weights/biases DMA'd once, stay VMEM-resident
    w1_spec = pl.BlockSpec((INPUT_SIZE, HIDDEN), lambda i: (0, 0))
    w_spec = pl.BlockSpec((HIDDEN, HIDDEN), lambda i: (0, 0))
    b_spec = pl.BlockSpec((1, HIDDEN), lambda i: (0, 0))

    out_sd = jax.ShapeDtypeStruct((m_pad, HIDDEN), OUT_DTYPE)

    oa, op_, on = pl.pallas_call(
        encoder_kernel,
        out_shape=(out_sd, out_sd, out_sd),
        grid_spec=pltpu.PrefetchScalarGridSpec(
            num_scalar_prefetch=0,
            grid=(n_steps,),
            in_specs=[act_spec, act_spec, act_spec,
                      w1_spec, b_spec, w_spec, b_spec, w_spec, b_spec],
            out_specs=[out_spec, out_spec, out_spec],
        ),
        compiler_params=pltpu.CompilerParams(
            dimension_semantics=("parallel",)),
    )(a, p, n, w1, b1, w2, b2, w3, b3)

    if m_pad != M:
        oa, op_, on = oa[:M], op_[:M], on[:M]
    return oa, op_, on


# --------------------------- parameter handling ------------------------------
def init_linear(key, in_f, out_f):
    """PyTorch-style nn.Linear init: U(-1/sqrt(fan_in), 1/sqrt(fan_in))."""
    kw, kb = jax.random.split(key)
    bound = 1.0 / jnp.sqrt(float(in_f))
    w = jax.random.uniform(kw, (out_f, in_f), jnp.float32, -bound, bound)
    b = jax.random.uniform(kb, (out_f,), jnp.float32, -bound, bound)
    return w, b


def init_bn(key, n):
    """BatchNorm1d params + (synthetic, deterministic) running stats."""
    kg, kb, km, kv = jax.random.split(key, 4)
    gamma = 1.0 + 0.1 * jax.random.normal(kg, (n,), jnp.float32)
    beta = 0.1 * jax.random.normal(kb, (n,), jnp.float32)
    mean = 0.1 * jax.random.normal(km, (n,), jnp.float32)
    var = jax.random.uniform(kv, (n,), jnp.float32, 0.5, 1.5)
    return gamma, beta, mean, var


def fuse_linear_bn(w, b, gamma, beta, mean, var):
    """Fold eval-mode BN into the preceding Linear.

    z = x @ W.T + b ;  bn(z) = (z - mean) * gamma / sqrt(var + eps) + beta
                             = x @ (W.T * s) + (b * s + t)
    """
    s = gamma / jnp.sqrt(var + BN_EPS)                        # (out,)
    t = beta - mean * s                                       # (out,)
    w_eff = (w.T * s[None, :]).astype(jnp.float32)            # (in, out)
    b_eff = (b * s + t).reshape(1, -1).astype(jnp.float32)    # (1, out)
    return w_eff, b_eff


def make_params(key):
    keys = jax.random.split(key, 6)
    w1, b1 = init_linear(keys[0], INPUT_SIZE, HIDDEN)
    w2, b2 = init_linear(keys[1], HIDDEN, HIDDEN)
    w3, b3 = init_linear(keys[2], HIDDEN, HIDDEN)
    bn1 = init_bn(keys[3], HIDDEN)
    bn2 = init_bn(keys[4], HIDDEN)
    bn3 = init_bn(keys[5], HIDDEN)
    w1e, b1e = fuse_linear_bn(w1, b1, *bn1)
    w2e, b2e = fuse_linear_bn(w2, b2, *bn2)
    w3e, b3e = fuse_linear_bn(w3, b3, *bn3)
    # bf16 weights: native MXU fast path + half the weight DMA bytes
    return (w1e.astype(jnp.bfloat16), b1e,        # (112, 128), (1, 128)
            w2e.astype(jnp.bfloat16), b2e,        # (128, 128), (1, 128)
            w3e.astype(jnp.bfloat16), b3e)        # (128, 128), (1, 128)


# ------------------------------ reference ------------------------------------
def encoder_ref(x, fused_params):
    """Plain-JAX reference with the same bf16-input / f32-accumulate numerics."""
    w1, b1, w2, b2, w3, b3 = fused_params
    h = jnp.dot(x.astype(jnp.bfloat16), w1, preferred_element_type=jnp.float32) + b1
    h = jnp.maximum(h, 0.0)
    h = jnp.dot(h.astype(jnp.bfloat16), w2, preferred_element_type=jnp.float32) + b2
    h = jnp.maximum(h, 0.0)
    h = jnp.dot(h.astype(jnp.bfloat16), w3, preferred_element_type=jnp.float32) + b3
    return h


@jax.jit
def siamese_forward(anchor, positive, negative, fused_params):
    return siamese_encoder_pallas(anchor, positive, negative, fused_params)


# --------------------------------- main ---------------------------------------
if __name__ == "__main__":
    key = jax.random.PRNGKey(0)
    kp, ka, kpos, kn = jax.random.split(key, 4)

    fused_params = make_params(kp)

    B = 8
    anchor = jax.random.normal(ka, (B, INPUT_SIZE), jnp.float32)
    positive = jax.random.normal(kpos, (B, INPUT_SIZE), jnp.float32)
    negative = jax.random.normal(kn, (B, INPUT_SIZE), jnp.float32)

    a_out, p_out, n_out = siamese_forward(anchor, positive, negative, fused_params)
    jax.block_until_ready((a_out, p_out, n_out))

    # sanity check against plain-JAX reference (same bf16/f32 mixed precision;
    # output is bf16, so use a tolerance that covers bf16 rounding)
    ok = True
    for got, x in ((a_out, anchor), (p_out, positive), (n_out, negative)):
        ref = encoder_ref(x, fused_params)
        assert got.shape == (B, HIDDEN)
        assert got.dtype == OUT_DTYPE
        err = float(jnp.max(jnp.abs(got.astype(jnp.float32) - ref)))
        ok = ok and jnp.allclose(got.astype(jnp.float32), ref, atol=3e-2, rtol=3e-2)
        assert ok, err

    print("KERNEL_OK")
</pallas_src>

<mosaic_0001>
module attributes {stable_mosaic.version = 11 : i64} {
  func.func @encoder_kernel(%arg0: i32, %arg1: memref<16x112xf32, #tpu.memory_space<vmem>>, %arg2: memref<16x112xf32, #tpu.memory_space<vmem>>, %arg3: memref<16x112xf32, #tpu.memory_space<vmem>>, %arg4: memref<112x128xbf16, #tpu.memory_space<vmem>>, %arg5: memref<1x128xf32, #tpu.memory_space<vmem>>, %arg6: memref<128x128xbf16, #tpu.memory_space<vmem>>, %arg7: memref<1x128xf32, #tpu.memory_space<vmem>>, %arg8: memref<128x128xbf16, #tpu.memory_space<vmem>>, %arg9: memref<1x128xf32, #tpu.memory_space<vmem>>, %arg10: memref<16x128xbf16, #tpu.memory_space<vmem>>, %arg11: memref<16x128xbf16, #tpu.memory_space<vmem>>, %arg12: memref<16x128xbf16, #tpu.memory_space<vmem>>) attributes {dimension_semantics = [#tpu.dimension_semantics<parallel>], iteration_bounds = array<i64: 1>, scalar_prefetch = 0 : i64, scratch_operands = 0 : i64, tpu.core_type = #tpu.core_type<tc>, window_params = [{transform_indices = @transform_0, window_bounds = array<i64: 16, 112>}, {transform_indices = @transform_1, window_bounds = array<i64: 16, 112>}, {transform_indices = @transform_2, window_bounds = array<i64: 16, 112>}, {pipeline_mode = #tpu.pipeline_mode<synchronous>, transform_indices = @transform_3, window_bounds = array<i64: 112, 128>}, {pipeline_mode = #tpu.pipeline_mode<synchronous>, transform_indices = @transform_4, window_bounds = array<i64: 1, 128>}, {pipeline_mode = #tpu.pipeline_mode<synchronous>, transform_indices = @transform_5, window_bounds = array<i64: 128, 128>}, {pipeline_mode = #tpu.pipeline_mode<synchronous>, transform_indices = @transform_6, window_bounds = array<i64: 1, 128>}, {pipeline_mode = #tpu.pipeline_mode<synchronous>, transform_indices = @transform_7, window_bounds = array<i64: 128, 128>}, {pipeline_mode = #tpu.pipeline_mode<synchronous>, transform_indices = @transform_8, window_bounds = array<i64: 1, 128>}, {transform_indices = @transform_9, window_bounds = array<i64: 16, 128>}, {transform_indices = @transform_10, window_bounds = array<i64: 16, 128>}, {transform_indices = @transform_11, window_bounds = array<i64: 16, 128>}]} {
    %c0 = arith.constant 0 : index
    %c0_0 = arith.constant 0 : index
    %0 = vector.load %arg1[%c0, %c0_0] : memref<16x112xf32, #tpu.memory_space<vmem>>, vector<16x112xf32>
    %1 = arith.truncf %0 : vector<16x112xf32> to vector<16x112xbf16>
    %c0_1 = arith.constant 0 : index
    %c0_2 = arith.constant 0 : index
    %2 = vector.load %arg4[%c0_1, %c0_2] : memref<112x128xbf16, #tpu.memory_space<vmem>>, vector<112x128xbf16>
    %cst = arith.constant dense<0.000000e+00> : vector<16x128xf32>
    %3 = tpu.matmul %1, %2, %cst {dimension_numbers = #tpu.dot_dimension_numbers<[1], [0], [0], [1], [0, 0, 1, 1], [], []>} : vector<16x112xbf16>, vector<112x128xbf16>, vector<16x128xf32> -> vector<16x128xf32>
    %c0_3 = arith.constant 0 : index
    %c0_4 = arith.constant 0 : index
    %4 = vector.load %arg5[%c0_3, %c0_4] : memref<1x128xf32, #tpu.memory_space<vmem>>, vector<1x128xf32>
    %5 = vector.broadcast %4 : vector<1x128xf32> to vector<16x128xf32>
    %6 = arith.addf %3, %5 : vector<16x128xf32>
    %cst_5 = arith.constant 0.000000e+00 : f32
    %7 = vector.broadcast %cst_5 : f32 to vector<16x128xf32>
    %8 = arith.maximumf %6, %7 : vector<16x128xf32>
    %9 = arith.truncf %8 : vector<16x128xf32> to vector<16x128xbf16>
    %c0_6 = arith.constant 0 : index
    %c0_7 = arith.constant 0 : index
    %10 = vector.load %arg6[%c0_6, %c0_7] : memref<128x128xbf16, #tpu.memory_space<vmem>>, vector<128x128xbf16>
    %cst_8 = arith.constant dense<0.000000e+00> : vector<16x128xf32>
    %11 = tpu.matmul %9, %10, %cst_8 {dimension_numbers = #tpu.dot_dimension_numbers<[1], [0], [0], [1], [0, 0, 1, 1], [], []>} : vector<16x128xbf16>, vector<128x128xbf16>, vector<16x128xf32> -> vector<16x128xf32>
    %c0_9 = arith.constant 0 : index
    %c0_10 = arith.constant 0 : index
    %12 = vector.load %arg7[%c0_9, %c0_10] : memref<1x128xf32, #tpu.memory_space<vmem>>, vector<1x128xf32>
    %13 = vector.broadcast %12 : vector<1x128xf32> to vector<16x128xf32>
    %14 = arith.addf %11, %13 : vector<16x128xf32>
    %cst_11 = arith.constant 0.000000e+00 : f32
    %15 = vector.broadcast %cst_11 : f32 to vector<16x128xf32>
    %16 = arith.maximumf %14, %15 : vector<16x128xf32>
    %17 = arith.truncf %16 : vector<16x128xf32> to vector<16x128xbf16>
    %c0_12 = arith.constant 0 : index
    %c0_13 = arith.constant 0 : index
    %18 = vector.load %arg8[%c0_12, %c0_13] : memref<128x128xbf16, #tpu.memory_space<vmem>>, vector<128x128xbf16>
    %cst_14 = arith.constant dense<0.000000e+00> : vector<16x128xf32>
    %19 = tpu.matmul %17, %18, %cst_14 {dimension_numbers = #tpu.dot_dimension_numbers<[1], [0], [0], [1], [0, 0, 1, 1], [], []>} : vector<16x128xbf16>, vector<128x128xbf16>, vector<16x128xf32> -> vector<16x128xf32>
    %c0_15 = arith.constant 0 : index
    %c0_16 = arith.constant 0 : index
    %20 = vector.load %arg9[%c0_15, %c0_16] : memref<1x128xf32, #tpu.memory_space<vmem>>, vector<1x128xf32>
    %21 = vector.broadcast %20 : vector<1x128xf32> to vector<16x128xf32>
    %22 = arith.addf %19, %21 : vector<16x128xf32>
    %23 = arith.truncf %22 : vector<16x128xf32> to vector<16x128xbf16>
    %c0_17 = arith.constant 0 : index
    %c0_18 = arith.constant 0 : index
    %24 = vector.load %arg10[%c0_17, %c0_18] : memref<16x128xbf16, #tpu.memory_space<vmem>>, vector<16x128xbf16>
    tpu.vector_store %arg10[%c0_17, %c0_18], %23 {strides = array<i32>} : memref<16x128xbf16, #tpu.memory_space<vmem>>, vector<16x128xbf16>,
    %c0_19 = arith.constant 0 : index
    %c0_20 = arith.constant 0 : index
    %25 = vector.load %arg2[%c0_19, %c0_20] : memref<16x112xf32, #tpu.memory_space<vmem>>, vector<16x112xf32>
    %26 = arith.truncf %25 : vector<16x112xf32> to vector<16x112xbf16>
    %c0_21 = arith.constant 0 : index
    %c0_22 = arith.constant 0 : index
    %27 = vector.load %arg4[%c0_21, %c0_22] : memref<112x128xbf16, #tpu.memory_space<vmem>>, vector<112x128xbf16>
    %cst_23 = arith.constant dense<0.000000e+00> : vector<16x128xf32>
    %28 = tpu.matmul %26, %27, %cst_23 {dimension_numbers = #tpu.dot_dimension_numbers<[1], [0], [0], [1], [0, 0, 1, 1], [], []>} : vector<16x112xbf16>, vector<112x128xbf16>, vector<16x128xf32> -> vector<16x128xf32>
    %c0_24 = arith.constant 0 : index
    %c0_25 = arith.constant 0 : index
    %29 = vector.load %arg5[%c0_24, %c0_25] : memref<1x128xf32, #tpu.memory_space<vmem>>, vector<1x128xf32>
    %30 = vector.broadcast %29 : vector<1x128xf32> to vector<16x128xf32>
    %31 = arith.addf %28, %30 : vector<16x128xf32>
    %cst_26 = arith.constant 0.000000e+00 : f32
    %32 = vector.broadcast %cst_26 : f32 to vector<16x128xf32>
    %33 = arith.maximumf %31, %32 : vector<16x128xf32>
    %34 = arith.truncf %33 : vector<16x128xf32> to vector<16x128xbf16>
    %c0_27 = arith.constant 0 : index
    %c0_28 = arith.constant 0 : index
    %35 = vector.load %arg6[%c0_27, %c0_28] : memref<128x128xbf16, #tpu.memory_space<vmem>>, vector<128x128xbf16>
    %cst_29 = arith.constant dense<0.000000e+00> : vector<16x128xf32>
    %36 = tpu.matmul %34, %35, %cst_29 {dimension_numbers = #tpu.dot_dimension_numbers<[1], [0], [0], [1], [0, 0, 1, 1], [], []>} : vector<16x128xbf16>, vector<128x128xbf16>, vector<16x128xf32> -> vector<16x128xf32>
    %c0_30 = arith.constant 0 : index
    %c0_31 = arith.constant 0 : index
    %37 = vector.load %arg7[%c0_30, %c0_31] : memref<1x128xf32, #tpu.memory_space<vmem>>, vector<1x128xf32>
    %38 = vector.broadcast %37 : vector<1x128xf32> to vector<16x128xf32>
    %39 = arith.addf %36, %38 : vector<16x128xf32>
    %cst_32 = arith.constant 0.000000e+00 : f32
    %40 = vector.broadcast %cst_32 : f32 to vector<16x128xf32>
    %41 = arith.maximumf %39, %40 : vector<16x128xf32>
    %42 = arith.truncf %41 : vector<16x128xf32> to vector<16x128xbf16>
    %c0_33 = arith.constant 0 : index
    %c0_34 = arith.constant 0 : index
    %43 = vector.load %arg8[%c0_33, %c0_34] : memref<128x128xbf16, #tpu.memory_space<vmem>>, vector<128x128xbf16>
    %cst_35 = arith.constant dense<0.000000e+00> : vector<16x128xf32>
    %44 = tpu.matmul %42, %43, %cst_35 {dimension_numbers = #tpu.dot_dimension_numbers<[1], [0], [0], [1], [0, 0, 1, 1], [], []>} : vector<16x128xbf16>, vector<128x128xbf16>, vector<16x128xf32> -> vector<16x128xf32>
    %c0_36 = arith.constant 0 : index
    %c0_37 = arith.constant 0 : index
    %45 = vector.load %arg9[%c0_36, %c0_37] : memref<1x128xf32, #tpu.memory_space<vmem>>, vector<1x128xf32>
    %46 = vector.broadcast %45 : vector<1x128xf32> to vector<16x128xf32>
    %47 = arith.addf %44, %46 : vector<16x128xf32>
    %48 = arith.truncf %47 : vector<16x128xf32> to vector<16x128xbf16>
    %c0_38 = arith.constant 0 : index
    %c0_39 = arith.constant 0 : index
    %49 = vector.load %arg11[%c0_38, %c0_39] : memref<16x128xbf16, #tpu.memory_space<vmem>>, vector<16x128xbf16>
    tpu.vector_store %arg11[%c0_38, %c0_39], %48 {strides = array<i32>} : memref<16x128xbf16, #tpu.memory_space<vmem>>, vector<16x128xbf16>,
    %c0_40 = arith.constant 0 : index
    %c0_41 = arith.constant 0 : index
    %50 = vector.load %arg3[%c0_40, %c0_41] : memref<16x112xf32, #tpu.memory_space<vmem>>, vector<16x112xf32>
    %51 = arith.truncf %50 : vector<16x112xf32> to vector<16x112xbf16>
    %c0_42 = arith.constant 0 : index
    %c0_43 = arith.constant 0 : index
    %52 = vector.load %arg4[%c0_42, %c0_43] : memref<112x128xbf16, #tpu.memory_space<vmem>>, vector<112x128xbf16>
    %cst_44 = arith.constant dense<0.000000e+00> : vector<16x128xf32>
    %53 = tpu.matmul %51, %52, %cst_44 {dimension_numbers = #tpu.dot_dimension_numbers<[1], [0], [0], [1], [0, 0, 1, 1], [], []>} : vector<16x112xbf16>, vector<112x128xbf16>, vector<16x128xf32> -> vector<16x128xf32>
    %c0_45 = arith.constant 0 : index
    %c0_46 = arith.constant 0 : index
    %54 = vector.load %arg5[%c0_45, %c0_46] : memref<1x128xf32, #tpu.memory_space<vmem>>, vector<1x128xf32>
    %55 = vector.broadcast %54 : vector<1x128xf32> to vector<16x128xf32>
    %56 = arith.addf %53, %55 : vector<16x128xf32>
    %cst_47 = arith.constant 0.000000e+00 : f32
    %57 = vector.broadcast %cst_47 : f32 to vector<16x128xf32>
    %58 = arith.maximumf %56, %57 : vector<16x128xf32>
    %59 = arith.truncf %58 : vector<16x128xf32> to vector<16x128xbf16>
    %c0_48 = arith.constant 0 : index
    %c0_49 = arith.constant 0 : index
    %60 = vector.load %arg6[%c0_48, %c0_49] : memref<128x128xbf16, #tpu.memory_space<vmem>>, vector<128x128xbf16>
    %cst_50 = arith.constant dense<0.000000e+00> : vector<16x128xf32>
    %61 = tpu.matmul %59, %60, %cst_50 {dimension_numbers = #tpu.dot_dimension_numbers<[1], [0], [0], [1], [0, 0, 1, 1], [], []>} : vector<16x128xbf16>, vector<128x128xbf16>, vector<16x128xf32> -> vector<16x128xf32>
    %c0_51 = arith.constant 0 : index
    %c0_52 = arith.constant 0 : index
    %62 = vector.load %arg7[%c0_51, %c0_52] : memref<1x128xf32, #tpu.memory_space<vmem>>, vector<1x128xf32>
    %63 = vector.broadcast %62 : vector<1x128xf32> to vector<16x128xf32>
    %64 = arith.addf %61, %63 : vector<16x128xf32>
    %cst_53 = arith.constant 0.000000e+00 : f32
    %65 = vector.broadcast %cst_53 : f32 to vector<16x128xf32>
    %66 = arith.maximumf %64, %65 : vector<16x128xf32>
    %67 = arith.truncf %66 : vector<16x128xf32> to vector<16x128xbf16>
    %c0_54 = arith.constant 0 : index
    %c0_55 = arith.constant 0 : index
    %68 = vector.load %arg8[%c0_54, %c0_55] : memref<128x128xbf16, #tpu.memory_space<vmem>>, vector<128x128xbf16>
    %cst_56 = arith.constant dense<0.000000e+00> : vector<16x128xf32>
    %69 = tpu.matmul %67, %68, %cst_56 {dimension_numbers = #tpu.dot_dimension_numbers<[1], [0], [0], [1], [0, 0, 1, 1], [], []>} : vector<16x128xbf16>, vector<128x128xbf16>, vector<16x128xf32> -> vector<16x128xf32>
    %c0_57 = arith.constant 0 : index
    %c0_58 = arith.constant 0 : index
    %70 = vector.load %arg9[%c0_57, %c0_58] : memref<1x128xf32, #tpu.memory_space<vmem>>, vector<1x128xf32>
    %71 = vector.broadcast %70 : vector<1x128xf32> to vector<16x128xf32>
    %72 = arith.addf %69, %71 : vector<16x128xf32>
    %73 = arith.truncf %72 : vector<16x128xf32> to vector<16x128xbf16>
    %c0_59 = arith.constant 0 : index
    %c0_60 = arith.constant 0 : index
    %74 = vector.load %arg12[%c0_59, %c0_60] : memref<16x128xbf16, #tpu.memory_space<vmem>>, vector<16x128xbf16>
    tpu.vector_store %arg12[%c0_59, %c0_60], %73 {strides = array<i32>} : memref<16x128xbf16, #tpu.memory_space<vmem>>, vector<16x128xbf16>,
    return
  }
  func.func @transform_0(%arg0: i32) -> (i32, i32) {
    %c0_i32 = arith.constant 0 : i32
    %c0_i32_0 = arith.constant 0 : i32
    return %arg0, %c0_i32 : i32, i32
  }
  func.func @transform_1(%arg0: i32) -> (i32, i32) {
    %c0_i32 = arith.constant 0 : i32
    %c0_i32_0 = arith.constant 0 : i32
    return %arg0, %c0_i32 : i32, i32
  }
  func.func @transform_2(%arg0: i32) -> (i32, i32) {
    %c0_i32 = arith.constant 0 : i32
    %c0_i32_0 = arith.constant 0 : i32
    return %arg0, %c0_i32 : i32, i32
  }
  func.func @transform_3(%arg0: i32) -> (i32, i32) {
    %c0_i32 = arith.constant 0 : i32
    %c0_i32_0 = arith.constant 0 : i32
    %c0_i32_1 = arith.constant 0 : i32
    return %c0_i32, %c0_i32_0 : i32, i32
  }
  func.func @transform_4(%arg0: i32) -> (i32, i32) {
    %c0_i32 = arith.constant 0 : i32
    %c0_i32_0 = arith.constant 0 : i32
    %c0_i32_1 = arith.constant 0 : i32
    return %c0_i32, %c0_i32_0 : i32, i32
  }
  func.func @transform_5(%arg0: i32) -> (i32, i32) {
    %c0_i32 = arith.constant 0 : i32
    %c0_i32_0 = arith.constant 0 : i32
    %c0_i32_1 = arith.constant 0 : i32
    return %c0_i32, %c0_i32_0 : i32, i32
  }
  func.func @transform_6(%arg0: i32) -> (i32, i32) {
    %c0_i32 = arith.constant 0 : i32
    %c0_i32_0 = arith.constant 0 : i32
    %c0_i32_1 = arith.constant 0 : i32
    return %c0_i32, %c0_i32_0 : i32, i32
  }
  func.func @transform_7(%arg0: i32) -> (i32, i32) {
    %c0_i32 = arith.constant 0 : i32
    %c0_i32_0 = arith.constant 0 : i32
    %c0_i32_1 = arith.constant 0 : i32
    return %c0_i32, %c0_i32_0 : i32, i32
  }
  func.func @transform_8(%arg0: i32) -> (i32, i32) {
    %c0_i32 = arith.constant 0 : i32
    %c0_i32_0 = arith.constant 0 : i32
    %c0_i32_1 = arith.constant 0 : i32
    return %c0_i32, %c0_i32_0 : i32, i32
  }
  func.func @transform_9(%arg0: i32) -> (i32, i32) {
    %c0_i32 = arith.constant 0 : i32
    %c0_i32_0 = arith.constant 0 : i32
    return %arg0, %c0_i32 : i32, i32
  }
  func.func @transform_10(%arg0: i32) -> (i32, i32) {
    %c0_i32 = arith.constant 0 : i32
    %c0_i32_0 = arith.constant 0 : i32
    return %arg0, %c0_i32 : i32, i32
  }
  func.func @transform_11(%arg0: i32) -> (i32, i32) {
    %c0_i32 = arith.constant 0 : i32
    %c0_i32_0 = arith.constant 0 : i32
    return %arg0, %c0_i32 : i32, i32
  }
}

</mosaic_0001>

<llo_original>
// kernel: siamese_forward.1
$region0: #{siamese_forward.1}
  #allocation0 [shape = 'u32[]', space=smem, size = 0x4, offset = 0x4, fixed_abs, tag = 'smem constant byte address 0x4 - core index']
  #allocation1 [shape = 'u32[72,128]{1,0:T(1,128)}', space=vmem, size = 0x9000, scoped, tag = 'internal scratch']
  %s0 = inlined_call_operand.vmem [shape: f32[16,112], index: 0, kind: input, shape index: {}]
  %s1 = inlined_call_operand.vmem [shape: f32[16,112], index: 1, kind: input, shape index: {}]
  %s2 = inlined_call_operand.vmem [shape: f32[16,112], index: 2, kind: input, shape index: {}]
  %s3 = inlined_call_operand.hbm [shape: bf16[112,128], index: 3, kind: input, shape index: {}]
  %s4 = inlined_call_operand.vmem [shape: f32[1,128], index: 4, kind: input, shape index: {}]
  %s5 = inlined_call_operand.hbm [shape: bf16[128,128], index: 5, kind: input, shape index: {}]
  %s6 = inlined_call_operand.vmem [shape: f32[1,128], index: 6, kind: input, shape index: {}]
  %s7 = inlined_call_operand.hbm [shape: bf16[128,128], index: 7, kind: input, shape index: {}]
  %s8 = inlined_call_operand.vmem [shape: f32[1,128], index: 8, kind: input, shape index: {}]
  %s9 = inlined_call_operand.vmem [shape: bf16[16,128], index: 9, kind: output, shape index: {0}]
  %s10 = inlined_call_operand.vmem [shape: bf16[16,128], index: 10, kind: output, shape index: {1}]
  %s11 = inlined_call_operand.vmem [shape: bf16[16,128], index: 11, kind: output, shape index: {2}]
  %12 = xla_tuple %s9, %s10, %s11
  %s13 = sld [smem:[#allocation0]]
  $region74: #{siamese_forward.1} parent=0
    _
  %s15 = ssub.s32 1, %s13
  %s16 = scalar_select 0, %s15, %s13
  $region1: #{siamese_forward.1} parent=0
    #allocation2 [shape = 'u8[28672]{0}', space=vmem, size = 0x7000, scoped, tag = 'input window, operand 3, single buffered']
    #allocation3 [shape = 's32[1]{0}', space=sflag, size = 0x4, scoped, tag = 'scoped memory for siamese_forward.1']
    #allocation4 [shape = 'u8[32768]{0}', space=vmem, size = 0x8000, scoped, tag = 'input window, operand 5, single buffered']
    #allocation5 [shape = 's32[1]{0}', space=sflag, size = 0x4, scoped, tag = 'scoped memory for siamese_forward.1']
    #allocation6 [shape = 'u8[32768]{0}', space=vmem, size = 0x8000, scoped, tag = 'input window, operand 7, single buffered']
    %17 = vsyncpa [#allocation3], 0
    %18 = vsyncpa [#allocation5], 0
    // Predicated region
    $region2: #{siamese_forward.1} parent=1 // pred_check
      _
    $region3: #{siamese_forward.1} parent=1 // pred_check_branch
      %20 = sbr.rel (0) target = $region5
    $region4: #{siamese_forward.1} parent=1 // pred_region
      _
    $region5: #{siamese_forward.1} parent=1 // pred_fallthru
      _
    // Predicated region
    $region6: #{siamese_forward.1} parent=1 // pred_check
      _
    $region7: #{siamese_forward.1} parent=1 // pred_check_branch
      %22 = sbr.rel (0) target = $region9
    $region8: #{siamese_forward.1} parent=1 // pred_region
      _
    $region9: #{siamese_forward.1} parent=1 // pred_fallthru
      _
    // Predicated region
    $region10: #{siamese_forward.1} parent=1 // pred_check
      _
    $region11: #{siamese_forward.1} parent=1 // pred_check_branch
      %24 = sbr.rel (0) target = $region13
    $region12: #{siamese_forward.1} parent=1 // pred_region
      _
    $region13: #{siamese_forward.1} parent=1 // pred_fallthru
      _
    // Predicated region
    $region14: #{siamese_forward.1} parent=1 // pred_check
      _
    $region15: #{siamese_forward.1} parent=1 // pred_check_branch
      %26 = sbr.rel (0) target = $region17
    $region16: #{siamese_forward.1} parent=1 // pred_region
      %28 = vsyncadd [#allocation3], 0
      %s29 = sshll.u32 %s3, 4
      %s30 = int_to_ptr.hbm [resolvable:$true] %s29
      %s31 = sshll.u32 [#allocation2], 4
      %s32 = int_to_ptr.vmem [resolvable:$true] %s31
      %37 = dma.hbm_to_vmem [thread:$0]  %s30, 896, %s32, [#allocation3], 64, 64, 4
    $region17: #{siamese_forward.1} parent=1 // pred_fallthru
      _
    // Predicated region
    $region18: #{siamese_forward.1} parent=1 // pred_check
      _
    $region19: #{siamese_forward.1} parent=1 // pred_check_branch
      %39 = sbr.rel (0) target = $region21
    $region20: #{siamese_forward.1} parent=1 // pred_region
      _
    $region21: #{siamese_forward.1} parent=1 // pred_fallthru
      _
    // Predicated region
    $region22: #{siamese_forward.1} parent=1 // pred_check
      _
    $region23: #{siamese_forward.1} parent=1 // pred_check_branch
      %41 = sbr.rel (0) target = $region25
    $region24: #{siamese_forward.1} parent=1 // pred_region
      %43 = vsyncadd [#allocation5], 0
      %s44 = sshll.u32 %s5, 4
      %s45 = int_to_ptr.hbm [resolvable:$true] %s44
      %s46 = sshll.u32 [#allocation4], 4
      %s47 = int_to_ptr.vmem [resolvable:$true] %s46
      %52 = dma.hbm_to_vmem [thread:$0]  %s45, 1024, %s47, [#allocation5], 64, 64, 4
    $region25: #{siamese_forward.1} parent=1 // pred_fallthru
      _
    // Predicated region
    $region26: #{siamese_forward.1} parent=1 // pred_check
      _
    $region27: #{siamese_forward.1} parent=1 // pred_check_branch
      %54 = sbr.rel (0) target = $region29
    $region28: #{siamese_forward.1} parent=1 // pred_region
      _
    $region29: #{siamese_forward.1} parent=1 // pred_fallthru
      _
    // Predicated region
    $region30: #{siamese_forward.1} parent=1 // pred_check
      _
    $region31: #{siamese_forward.1} parent=1 // pred_check_branch
      %56 = sbr.rel (0) target = $region33
    $region32: #{siamese_forward.1} parent=1 // pred_region
      %58 = vsyncadd [#allocation5], 0
      %s59 = sshll.u32 %s7, 4
      %s60 = int_to_ptr.hbm [resolvable:$true] %s59
      %s61 = sshll.u32 [#allocation6], 4
      %s62 = int_to_ptr.vmem [resolvable:$true] %s61
      %67 = dma.hbm_to_vmem [thread:$0]  %s60, 1024, %s62, [#allocation5], 64, 64, 4
    $region33: #{siamese_forward.1} parent=1 // pred_fallthru
      _
    // Predicated region
    $region34: #{siamese_forward.1} parent=1 // pred_check
      _
    $region35: #{siamese_forward.1} parent=1 // pred_check_branch
      %69 = sbr.rel (0) target = $region37
    $region36: #{siamese_forward.1} parent=1 // pred_region
      _
    $region37: #{siamese_forward.1} parent=1 // pred_fallthru
      _
    // Predicated region
    $region38: #{siamese_forward.1} parent=1 // pred_check
      _
    $region39: #{siamese_forward.1} parent=1 // pred_check_branch
      %71 = sbr.rel (0) target = $region41
    $region40: #{siamese_forward.1} parent=1 // pred_region
      %73 = dma.done [#allocation3], 896
    $region41: #{siamese_forward.1} parent=1 // pred_fallthru
      _
    // Predicated region
    $region42: #{siamese_forward.1} parent=1 // pred_check
      _
    $region43: #{siamese_forward.1} parent=1 // pred_check_branch
      %75 = sbr.rel (0) target = $region45
    $region44: #{siamese_forward.1} parent=1 // pred_region
      %77 = dma.done [#allocation5], 1024
    $region45: #{siamese_forward.1} parent=1 // pred_fallthru
      _
    // Predicated region
    $region46: #{siamese_forward.1} parent=1 // pred_check
      _
    $region47: #{siamese_forward.1} parent=1 // pred_check_branch
      %79 = sbr.rel (0) target = $region49
    $region48: #{siamese_forward.1} parent=1 // pred_region
      %81 = dma.done [#allocation5], 1024
    $region49: #{siamese_forward.1} parent=1 // pred_fallthru
      _
    %v83 = vld [vmem:[%s0] sm:$0xff]
    %v84 = vld [vmem:[%s0 + $0x8] sm:$0xff]
    %v85 = vpack.c.bf16 %v84, %v83
    %v86 = vld [vmem:[#allocation2] sm:$0xf]
    %v87 = vld [vmem:[#allocation2 + $0x4] sm:$0xf]
    %v88 = vld [vmem:[#allocation2 + $0x8] sm:$0xf]
    %v89 = vld [vmem:[#allocation2 + $0xc] sm:$0xf]
    %v90 = vld [vmem:[#allocation2 + $0x10] sm:$0xf]
    %v91 = vld [vmem:[#allocation2 + $0x14] sm:$0xf]
    %v92 = vld [vmem:[#allocation2 + $0x18] sm:$0xf]
    %v93 = vld [vmem:[#allocation2 + $0x1c] sm:$0xf]
    %v94 = vld [vmem:[#allocation2 + $0x20] sm:$0xf]
    %v95 = vld [vmem:[#allocation2 + $0x24] sm:$0xf]
    %v96 = vld [vmem:[#allocation2 + $0x28] sm:$0xf]
    %v97 = vld [vmem:[#allocation2 + $0x2c] sm:$0xf]
    %v98 = vld [vmem:[#allocation2 + $0x30] sm:$0xf]
    %v99 = vld [vmem:[#allocation2 + $0x34] sm:$0xf]
    %v100 = vld [vmem:[%s4] sm:$0x1]
    %v102 = vperm.slane %v100, 0
    %v118 = vunpack.c.l.b16 %v86
    %v119 = vunpack.c.l.b16 %v87
    %v120 = vunpack.c.l.b16 %v88
    %v121 = vunpack.c.l.b16 %v89
    %v122 = vunpack.c.l.b16 %v90
    %v123 = vunpack.c.l.b16 %v91
    %v124 = vunpack.c.l.b16 %v92
    %v125 = vunpack.c.l.b16 %v93
    %v126 = vunpack.c.l.b16 %v94
    %v127 = vunpack.c.l.b16 %v95
    %v128 = vunpack.c.l.b16 %v96
    %v129 = vunpack.c.l.b16 %v97
    %v130 = vunpack.c.l.b16 %v98
    %v131 = vunpack.c.l.b16 %v99
    %v132 = vpack.c.b16 %v119, %v118
    %v133 = vpack.c.b16 %v121, %v120
    %v134 = vpack.c.b16 %v123, %v122
    %v135 = vpack.c.b16 %v125, %v124
    %v136 = vpack.c.b16 %v127, %v126
    %v137 = vpack.c.b16 %v129, %v128
    %v138 = vpack.c.b16 %v131, %v130
    %vm146 = vcmask 916480
    %v148 = vsel %vm146, %v85, 0
    %150 = vmatpush.bf16.msra.mxu0 0
    %151 = vmatpush.bf16.msra.mxu0 %v138
    %152 = vmatpush.bf16.msra.mxu0 %v137
    %153 = vmatpush.bf16.msra.mxu0 %v136
    %154 = vmatpush.bf16.msra.mxu0 %v135
    %155 = vmatpush.bf16.msra.mxu0 %v134
    %156 = vmatpush.bf16.msra.mxu0 %v133
    %157 = vmatpush.bf16.msra.mxu0 %v132
    %158 = vmatmul.bf16.gmra.mxu0 %v148
    %v159 = vpop.f32.mrf.mxu0
    %v160 = vadd.f32 %v102, %v159
    %v161 = vpop.f32.mrf.mxu0
    %v162 = vadd.f32 %v102, %v161
    %163 = vdwg.mxu0
    %v164 = vmax.f32 %v160, 0.0
    %v165 = vmax.f32 %v162, 0.0
    %v166 = vpack.c.bf16 %v165, %v164
    %v167 = vld [vmem:[#allocation4] sm:$0xf]
    %v168 = vld [vmem:[#allocation4 + $0x4] sm:$0xf]
    %v169 = vld [vmem:[#allocation4 + $0x8] sm:$0xf]
    %v170 = vld [vmem:[#allocation4 + $0xc] sm:$0xf]
    %v171 = vld [vmem:[#allocation4 + $0x10] sm:$0xf]
    %v172 = vld [vmem:[#allocation4 + $0x14] sm:$0xf]
    %v173 = vld [vmem:[#allocation4 + $0x18] sm:$0xf]
    %v174 = vld [vmem:[#allocation4 + $0x1c] sm:$0xf]
    %v175 = vld [vmem:[#allocation4 + $0x20] sm:$0xf]
    %v176 = vld [vmem:[#allocation4 + $0x24] sm:$0xf]
    %v177 = vld [vmem:[#allocation4 + $0x28] sm:$0xf]
    %v178 = vld [vmem:[#allocation4 + $0x2c] sm:$0xf]
    %v179 = vld [vmem:[#allocation4 + $0x30] sm:$0xf]
    %v180 = vld [vmem:[#allocation4 + $0x34] sm:$0xf]
    %v181 = vld [vmem:[#allocation4 + $0x38] sm:$0xf]
    %v182 = vld [vmem:[#allocation4 + $0x3c] sm:$0xf]
    %v183 = vld [vmem:[%s6] sm:$0x1]
    %v185 = vperm.slane %v183, 0
    %v203 = vunpack.c.l.b16 %v167
    %v204 = vunpack.c.l.b16 %v168
    %v205 = vunpack.c.l.b16 %v169
    %v206 = vunpack.c.l.b16 %v170
    %v207 = vunpack.c.l.b16 %v171
    %v208 = vunpack.c.l.b16 %v172
    %v209 = vunpack.c.l.b16 %v173
    %v210 = vunpack.c.l.b16 %v174
    %v211 = vunpack.c.l.b16 %v175
    %v212 = vunpack.c.l.b16 %v176
    %v213 = vunpack.c.l.b16 %v177
    %v214 = vunpack.c.l.b16 %v178
    %v215 = vunpack.c.l.b16 %v179
    %v216 = vunpack.c.l.b16 %v180
    %v217 = vunpack.c.l.b16 %v181
    %v218 = vunpack.c.l.b16 %v182
    %v219 = vpack.c.b16 %v204, %v203
    %v220 = vpack.c.b16 %v206, %v205
    %v221 = vpack.c.b16 %v208, %v207
    %v222 = vpack.c.b16 %v210, %v209
    %v223 = vpack.c.b16 %v212, %v211
    %v224 = vpack.c.b16 %v214, %v213
    %v225 = vpack.c.b16 %v216, %v215
    %v226 = vpack.c.b16 %v218, %v217
    %235 = vmatpush.bf16.msra.mxu0 %v226
    %236 = vmatpush.bf16.msra.mxu0 %v225
    %237 = vmatpush.bf16.msra.mxu0 %v224
    %238 = vmatpush.bf16.msra.mxu0 %v223
    %239 = vmatpush.bf16.msra.mxu0 %v222
    %240 = vmatpush.bf16.msra.mxu0 %v221
    %241 = vmatpush.bf16.msra.mxu0 %v220
    %242 = vmatpush.bf16.msra.mxu0 %v219
    %243 = vmatmul.bf16.gmra.mxu0 %v166
    %v244 = vpop.f32.mrf.mxu0
    %v245 = vadd.f32 %v185, %v244
    %v246 = vpop.f32.mrf.mxu0
    %v247 = vadd.f32 %v185, %v246
    %248 = vdwg.mxu0
    %v249 = vmax.f32 %v245, 0.0
    %v250 = vmax.f32 %v247, 0.0
    %v251 = vpack.c.bf16 %v250, %v249
    %v252 = vld [vmem:[#allocation6] sm:$0xf]
    %v253 = vld [vmem:[#allocation6 + $0x4] sm:$0xf]
    %v254 = vld [vmem:[#allocation6 + $0x8] sm:$0xf]
    %v255 = vld [vmem:[#allocation6 + $0xc] sm:$0xf]
    %v256 = vld [vmem:[#allocation6 + $0x10] sm:$0xf]
    %v257 = vld [vmem:[#allocation6 + $0x14] sm:$0xf]
    %v258 = vld [vmem:[#allocation6 + $0x18] sm:$0xf]
    %v259 = vld [vmem:[#allocation6 + $0x1c] sm:$0xf]
    %v260 = vld [vmem:[#allocation6 + $0x20] sm:$0xf]
    %v261 = vld [vmem:[#allocation6 + $0x24] sm:$0xf]
    %v262 = vld [vmem:[#allocation6 + $0x28] sm:$0xf]
    %v263 = vld [vmem:[#allocation6 + $0x2c] sm:$0xf]
    %v264 = vld [vmem:[#allocation6 + $0x30] sm:$0xf]
    %v265 = vld [vmem:[#allocation6 + $0x34] sm:$0xf]
    %v266 = vld [vmem:[#allocation6 + $0x38] sm:$0xf]
    %v267 = vld [vmem:[#allocation6 + $0x3c] sm:$0xf]
    %v268 = vld [vmem:[%s8] sm:$0x1]
    %v270 = vperm.slane %v268, 0
    %v288 = vunpack.c.l.b16 %v252
    %v289 = vunpack.c.l.b16 %v253
    %v290 = vunpack.c.l.b16 %v254
    %v291 = vunpack.c.l.b16 %v255
    %v292 = vunpack.c.l.b16 %v256
    %v293 = vunpack.c.l.b16 %v257
    %v294 = vunpack.c.l.b16 %v258
    %v295 = vunpack.c.l.b16 %v259
    %v296 = vunpack.c.l.b16 %v260
    %v297 = vunpack.c.l.b16 %v261
    %v298 = vunpack.c.l.b16 %v262
    %v299 = vunpack.c.l.b16 %v263
    %v300 = vunpack.c.l.b16 %v264
    %v301 = vunpack.c.l.b16 %v265
    %v302 = vunpack.c.l.b16 %v266
    %v303 = vunpack.c.l.b16 %v267
    %v304 = vpack.c.b16 %v289, %v288
    %v305 = vpack.c.b16 %v291, %v290
    %v306 = vpack.c.b16 %v293, %v292
    %v307 = vpack.c.b16 %v295, %v294
    %v308 = vpack.c.b16 %v297, %v296
    %v309 = vpack.c.b16 %v299, %v298
    %v310 = vpack.c.b16 %v301, %v300
    %v311 = vpack.c.b16 %v303, %v302
    %320 = vmatpush.bf16.msra.mxu0 %v311
    %321 = vmatpush.bf16.msra.mxu0 %v310
    %322 = vmatpush.bf16.msra.mxu0 %v309
    %323 = vmatpush.bf16.msra.mxu0 %v308
    %324 = vmatpush.bf16.msra.mxu0 %v307
    %325 = vmatpush.bf16.msra.mxu0 %v306
    %326 = vmatpush.bf16.msra.mxu0 %v305
    %327 = vmatpush.bf16.msra.mxu0 %v304
    %328 = vmatmul.bf16.gmra.mxu0 %v251
    %v329 = vpop.f32.mrf.mxu0
    %v330 = vadd.f32 %v270, %v329
    %v331 = vpop.f32.mrf.mxu0
    %v332 = vadd.f32 %v270, %v331
    %333 = vdwg.mxu0
    %v334 = vpack.c.bf16 %v330, %v330
    %v335 = vpack.c.bf16 %v332, %v332
    %336 = vst [vmem:[%s9] sm:$0xf] %v334
    %337 = vst [vmem:[%s9 + $0x4] sm:$0xf] %v335
    %v338 = vld [vmem:[%s1] sm:$0xff]
    %v339 = vld [vmem:[%s1 + $0x8] sm:$0xff]
    %v340 = vpack.c.bf16 %v339, %v338
    %v341 = vld [vmem:[#allocation2] sm:$0xf]
    %v342 = vld [vmem:[#allocation2 + $0x4] sm:$0xf]
    %v343 = vld [vmem:[#allocation2 + $0x8] sm:$0xf]
    %v344 = vld [vmem:[#allocation2 + $0xc] sm:$0xf]
    %v345 = vld [vmem:[#allocation2 + $0x10] sm:$0xf]
    %v346 = vld [vmem:[#allocation2 + $0x14] sm:$0xf]
    %v347 = vld [vmem:[#allocation2 + $0x18] sm:$0xf]
    %v348 = vld [vmem:[#allocation2 + $0x1c] sm:$0xf]
    %v349 = vld [vmem:[#allocation2 + $0x20] sm:$0xf]
    %v350 = vld [vmem:[#allocation2 + $0x24] sm:$0xf]
    %v351 = vld [vmem:[#allocation2 + $0x28] sm:$0xf]
    %v352 = vld [vmem:[#allocation2 + $0x2c] sm:$0xf]
    %v353 = vld [vmem:[#allocation2 + $0x30] sm:$0xf]
    %v354 = vld [vmem:[#allocation2 + $0x34] sm:$0xf]
    %v355 = vld [vmem:[%s4] sm:$0x1]
    %v357 = vperm.slane %v355, 0
    %v373 = vunpack.c.l.b16 %v341
    %v374 = vunpack.c.l.b16 %v342
    %v375 = vunpack.c.l.b16 %v343
    %v376 = vunpack.c.l.b16 %v344
    %v377 = vunpack.c.l.b16 %v345
    %v378 = vunpack.c.l.b16 %v346
    %v379 = vunpack.c.l.b16 %v347
    %v380 = vunpack.c.l.b16 %v348
    %v381 = vunpack.c.l.b16 %v349
    %v382 = vunpack.c.l.b16 %v350
    %v383 = vunpack.c.l.b16 %v351
    %v384 = vunpack.c.l.b16 %v352
    %v385 = vunpack.c.l.b16 %v353
    %v386 = vunpack.c.l.b16 %v354
    %v387 = vpack.c.b16 %v374, %v373
    %v388 = vpack.c.b16 %v376, %v375
    %v389 = vpack.c.b16 %v378, %v377
    %v390 = vpack.c.b16 %v380, %v379
    %v391 = vpack.c.b16 %v382, %v381
    %v392 = vpack.c.b16 %v384, %v383
    %v393 = vpack.c.b16 %v386, %v385
    %v402 = vsel %vm146, %v340, 0
    %404 = vmatpush.bf16.msra.mxu0 0
    %405 = vmatpush.bf16.msra.mxu0 %v393
    %406 = vmatpush.bf16.msra.mxu0 %v392
    %407 = vmatpush.bf16.msra.mxu0 %v391
    %408 = vmatpush.bf16.msra.mxu0 %v390
    %409 = vmatpush.bf16.msra.mxu0 %v389
    %410 = vmatpush.bf16.msra.mxu0 %v388
    %411 = vmatpush.bf16.msra.mxu0 %v387
    %412 = vmatmul.bf16.gmra.mxu0 %v402
    %v413 = vpop.f32.mrf.mxu0
    %v414 = vadd.f32 %v357, %v413
    %v415 = vpop.f32.mrf.mxu0
    %v416 = vadd.f32 %v357, %v415
    %417 = vdwg.mxu0
    %v418 = vmax.f32 %v414, 0.0
    %v419 = vmax.f32 %v416, 0.0
    %v420 = vpack.c.bf16 %v419, %v418
    %v421 = vld [vmem:[#allocation4] sm:$0xf]
    %v422 = vld [vmem:[#allocation4 + $0x4] sm:$0xf]
    %v423 = vld [vmem:[#allocation4 + $0x8] sm:$0xf]
    %v424 = vld [vmem:[#allocation4 + $0xc] sm:$0xf]
    %v425 = vld [vmem:[#allocation4 + $0x10] sm:$0xf]
    %v426 = vld [vmem:[#allocation4 + $0x14] sm:$0xf]
    %v427 = vld [vmem:[#allocation4 + $0x18] sm:$0xf]
    %v428 = vld [vmem:[#allocation4 + $0x1c] sm:$0xf]
    %v429 = vld [vmem:[#allocation4 + $0x20] sm:$0xf]
    %v430 = vld [vmem:[#allocation4 + $0x24] sm:$0xf]
    %v431 = vld [vmem:[#allocation4 + $0x28] sm:$0xf]
    %v432 = vld [vmem:[#allocation4 + $0x2c] sm:$0xf]
    %v433 = vld [vmem:[#allocation4 + $0x30] sm:$0xf]
    %v434 = vld [vmem:[#allocation4 + $0x34] sm:$0xf]
    %v435 = vld [vmem:[#allocation4 + $0x38] sm:$0xf]
    %v436 = vld [vmem:[#allocation4 + $0x3c] sm:$0xf]
    %v437 = vld [vmem:[%s6] sm:$0x1]
    %v439 = vperm.slane %v437, 0
    %v457 = vunpack.c.l.b16 %v421
    %v458 = vunpack.c.l.b16 %v422
    %v459 = vunpack.c.l.b16 %v423
    %v460 = vunpack.c.l.b16 %v424
    %v461 = vunpack.c.l.b16 %v425
    %v462 = vunpack.c.l.b16 %v426
    %v463 = vunpack.c.l.b16 %v427
    %v464 = vunpack.c.l.b16 %v428
    %v465 = vunpack.c.l.b16 %v429
    %v466 = vunpack.c.l.b16 %v430
    %v467 = vunpack.c.l.b16 %v431
    %v468 = vunpack.c.l.b16 %v432
    %v469 = vunpack.c.l.b16 %v433
    %v470 = vunpack.c.l.b16 %v434
    %v471 = vunpack.c.l.b16 %v435
    %v472 = vunpack.c.l.b16 %v436
    %v473 = vpack.c.b16 %v458, %v457
    %v474 = vpack.c.b16 %v460, %v459
    %v475 = vpack.c.b16 %v462, %v461
    %v476 = vpack.c.b16 %v464, %v463
    %v477 = vpack.c.b16 %v466, %v465
    %v478 = vpack.c.b16 %v468, %v467
    %v479 = vpack.c.b16 %v470, %v469
    %v480 = vpack.c.b16 %v472, %v471
    %489 = vmatpush.bf16.msra.mxu0 %v480
    %490 = vmatpush.bf16.msra.mxu0 %v479
    %491 = vmatpush.bf16.msra.mxu0 %v478
    %492 = vmatpush.bf16.msra.mxu0 %v477
    %493 = vmatpush.bf16.msra.mxu0 %v476
    %494 = vmatpush.bf16.msra.mxu0 %v475
    %495 = vmatpush.bf16.msra.mxu0 %v474
    %496 = vmatpush.bf16.msra.mxu0 %v473
    %497 = vmatmul.bf16.gmra.mxu0 %v420
    %v498 = vpop.f32.mrf.mxu0
    %v499 = vadd.f32 %v439, %v498
    %v500 = vpop.f32.mrf.mxu0
    %v501 = vadd.f32 %v439, %v500
    %502 = vdwg.mxu0
    %v503 = vmax.f32 %v499, 0.0
    %v504 = vmax.f32 %v501, 0.0
    %v505 = vpack.c.bf16 %v504, %v503
    %v506 = vld [vmem:[#allocation6] sm:$0xf]
    %v507 = vld [vmem:[#allocation6 + $0x4] sm:$0xf]
    %v508 = vld [vmem:[#allocation6 + $0x8] sm:$0xf]
    %v509 = vld [vmem:[#allocation6 + $0xc] sm:$0xf]
    %v510 = vld [vmem:[#allocation6 + $0x10] sm:$0xf]
    %v511 = vld [vmem:[#allocation6 + $0x14] sm:$0xf]
    %v512 = vld [vmem:[#allocation6 + $0x18] sm:$0xf]
    %v513 = vld [vmem:[#allocation6 + $0x1c] sm:$0xf]
    %v514 = vld [vmem:[#allocation6 + $0x20] sm:$0xf]
    %v515 = vld [vmem:[#allocation6 + $0x24] sm:$0xf]
    %v516 = vld [vmem:[#allocation6 + $0x28] sm:$0xf]
    %v517 = vld [vmem:[#allocation6 + $0x2c] sm:$0xf]
    %v518 = vld [vmem:[#allocation6 + $0x30] sm:$0xf]
    %v519 = vld [vmem:[#allocation6 + $0x34] sm:$0xf]
    %v520 = vld [vmem:[#allocation6 + $0x38] sm:$0xf]
    %v521 = vld [vmem:[#allocation6 + $0x3c] sm:$0xf]
    %v522 = vld [vmem:[%s8] sm:$0x1]
    %v524 = vperm.slane %v522, 0
    %v542 = vunpack.c.l.b16 %v506
    %v543 = vunpack.c.l.b16 %v507
    %v544 = vunpack.c.l.b16 %v508
    %v545 = vunpack.c.l.b16 %v509
    %v546 = vunpack.c.l.b16 %v510
    %v547 = vunpack.c.l.b16 %v511
    %v548 = vunpack.c.l.b16 %v512
    %v549 = vunpack.c.l.b16 %v513
    %v550 = vunpack.c.l.b16 %v514
    %v551 = vunpack.c.l.b16 %v515
    %v552 = vunpack.c.l.b16 %v516
    %v553 = vunpack.c.l.b16 %v517
    %v554 = vunpack.c.l.b16 %v518
    %v555 = vunpack.c.l.b16 %v519
    %v556 = vunpack.c.l.b16 %v520
    %v557 = vunpack.c.l.b16 %v521
    %v558 = vpack.c.b16 %v543, %v542
    %v559 = vpack.c.b16 %v545, %v544
    %v560 = vpack.c.b16 %v547, %v546
    %v561 = vpack.c.b16 %v549, %v548
    %v562 = vpack.c.b16 %v551, %v550
    %v563 = vpack.c.b16 %v553, %v552
    %v564 = vpack.c.b16 %v555, %v554
    %v565 = vpack.c.b16 %v557, %v556
    %574 = vmatpush.bf16.msra.mxu0 %v565
    %575 = vmatpush.bf16.msra.mxu0 %v564
    %576 = vmatpush.bf16.msra.mxu0 %v563
    %577 = vmatpush.bf16.msra.mxu0 %v562
    %578 = vmatpush.bf16.msra.mxu0 %v561
    %579 = vmatpush.bf16.msra.mxu0 %v560
    %580 = vmatpush.bf16.msra.mxu0 %v559
    %581 = vmatpush.bf16.msra.mxu0 %v558
    %582 = vmatmul.bf16.gmra.mxu0 %v505
    %v583 = vpop.f32.mrf.mxu0
    %v584 = vadd.f32 %v524, %v583
    %v585 = vpop.f32.mrf.mxu0
    %v586 = vadd.f32 %v524, %v585
    %587 = vdwg.mxu0
    %v588 = vpack.c.bf16 %v584, %v584
    %v589 = vpack.c.bf16 %v586, %v586
    %590 = vst [vmem:[%s10] sm:$0xf] %v588
    %591 = vst [vmem:[%s10 + $0x4] sm:$0xf] %v589
    %v592 = vld [vmem:[%s2] sm:$0xff]
    %v593 = vld [vmem:[%s2 + $0x8] sm:$0xff]
    %v594 = vpack.c.bf16 %v593, %v592
    %v595 = vld [vmem:[#allocation2] sm:$0xf]
    %v596 = vld [vmem:[#allocation2 + $0x4] sm:$0xf]
    %v597 = vld [vmem:[#allocation2 + $0x8] sm:$0xf]
    %v598 = vld [vmem:[#allocation2 + $0xc] sm:$0xf]
    %v599 = vld [vmem:[#allocation2 + $0x10] sm:$0xf]
    %v600 = vld [vmem:[#allocation2 + $0x14] sm:$0xf]
    %v601 = vld [vmem:[#allocation2 + $0x18] sm:$0xf]
    %v602 = vld [vmem:[#allocation2 + $0x1c] sm:$0xf]
    %v603 = vld [vmem:[#allocation2 + $0x20] sm:$0xf]
    %v604 = vld [vmem:[#allocation2 + $0x24] sm:$0xf]
    %v605 = vld [vmem:[#allocation2 + $0x28] sm:$0xf]
    %v606 = vld [vmem:[#allocation2 + $0x2c] sm:$0xf]
    %v607 = vld [vmem:[#allocation2 + $0x30] sm:$0xf]
    %v608 = vld [vmem:[#allocation2 + $0x34] sm:$0xf]
    %v609 = vld [vmem:[%s4] sm:$0x1]
    %v611 = vperm.slane %v609, 0
    %v627 = vunpack.c.l.b16 %v595
    %v628 = vunpack.c.l.b16 %v596
    %v629 = vunpack.c.l.b16 %v597
    %v630 = vunpack.c.l.b16 %v598
    %v631 = vunpack.c.l.b16 %v599
    %v632 = vunpack.c.l.b16 %v600
    %v633 = vunpack.c.l.b16 %v601
    %v634 = vunpack.c.l.b16 %v602
    %v635 = vunpack.c.l.b16 %v603
    %v636 = vunpack.c.l.b16 %v604
    %v637 = vunpack.c.l.b16 %v605
    %v638 = vunpack.c.l.b16 %v606
    %v639 = vunpack.c.l.b16 %v607
    %v640 = vunpack.c.l.b16 %v608
    %v641 = vpack.c.b16 %v628, %v627
    %v642 = vpack.c.b16 %v630, %v629
    %v643 = vpack.c.b16 %v632, %v631
    %v644 = vpack.c.b16 %v634, %v633
    %v645 = vpack.c.b16 %v636, %v635
    %v646 = vpack.c.b16 %v638, %v637
    %v647 = vpack.c.b16 %v640, %v639
    %v656 = vsel %vm146, %v594, 0
    %658 = vmatpush.bf16.msra.mxu0 0
    %659 = vmatpush.bf16.msra.mxu0 %v647
    %660 = vmatpush.bf16.msra.mxu0 %v646
    %661 = vmatpush.bf16.msra.mxu0 %v645
    %662 = vmatpush.bf16.msra.mxu0 %v644
    %663 = vmatpush.bf16.msra.mxu0 %v643
    %664 = vmatpush.bf16.msra.mxu0 %v642
    %665 = vmatpush.bf16.msra.mxu0 %v641
    %666 = vmatmul.bf16.gmra.mxu0 %v656
    %v667 = vpop.f32.mrf.mxu0
    %v668 = vadd.f32 %v611, %v667
    %v669 = vpop.f32.mrf.mxu0
    %v670 = vadd.f32 %v611, %v669
    %671 = vdwg.mxu0
    %v672 = vmax.f32 %v668, 0.0
    %v673 = vmax.f32 %v670, 0.0
    %v674 = vpack.c.bf16 %v673, %v672
    %v675 = vld [vmem:[#allocation4] sm:$0xf]
    %v676 = vld [vmem:[#allocation4 + $0x4] sm:$0xf]
    %v677 = vld [vmem:[#allocation4 + $0x8] sm:$0xf]
    %v678 = vld [vmem:[#allocation4 + $0xc] sm:$0xf]
    %v679 = vld [vmem:[#allocation4 + $0x10] sm:$0xf]
    %v680 = vld [vmem:[#allocation4 + $0x14] sm:$0xf]
    %v681 = vld [vmem:[#allocation4 + $0x18] sm:$0xf]
    %v682 = vld [vmem:[#allocation4 + $0x1c] sm:$0xf]
    %v683 = vld [vmem:[#allocation4 + $0x20] sm:$0xf]
    %v684 = vld [vmem:[#allocation4 + $0x24] sm:$0xf]
    %v685 = vld [vmem:[#allocation4 + $0x28] sm:$0xf]
    %v686 = vld [vmem:[#allocation4 + $0x2c] sm:$0xf]
    %v687 = vld [vmem:[#allocation4 + $0x30] sm:$0xf]
    %v688 = vld [vmem:[#allocation4 + $0x34] sm:$0xf]
    %v689 = vld [vmem:[#allocation4 + $0x38] sm:$0xf]
    %v690 = vld [vmem:[#allocation4 + $0x3c] sm:$0xf]
    %v691 = vld [vmem:[%s6] sm:$0x1]
    %v693 = vperm.slane %v691, 0
    %v711 = vunpack.c.l.b16 %v675
    %v712 = vunpack.c.l.b16 %v676
    %v713 = vunpack.c.l.b16 %v677
    %v714 = vunpack.c.l.b16 %v678
    %v715 = vunpack.c.l.b16 %v679
    %v716 = vunpack.c.l.b16 %v680
    %v717 = vunpack.c.l.b16 %v681
    %v718 = vunpack.c.l.b16 %v682
    %v719 = vunpack.c.l.b16 %v683
    %v720 = vunpack.c.l.b16 %v684
    %v721 = vunpack.c.l.b16 %v685
    %v722 = vunpack.c.l.b16 %v686
    %v723 = vunpack.c.l.b16 %v687
    %v724 = vunpack.c.l.b16 %v688
    %v725 = vunpack.c.l.b16 %v689
    %v726 = vunpack.c.l.b16 %v690
    %v727 = vpack.c.b16 %v712, %v711
    %v728 = vpack.c.b16 %v714, %v713
    %v729 = vpack.c.b16 %v716, %v715
    %v730 = vpack.c.b16 %v718, %v717
    %v731 = vpack.c.b16 %v720, %v719
    %v732 = vpack.c.b16 %v722, %v721
    %v733 = vpack.c.b16 %v724, %v723
    %v734 = vpack.c.b16 %v726, %v725
    %743 = vmatpush.bf16.msra.mxu0 %v734
    %744 = vmatpush.bf16.msra.mxu0 %v733
    %745 = vmatpush.bf16.msra.mxu0 %v732
    %746 = vmatpush.bf16.msra.mxu0 %v731
    %747 = vmatpush.bf16.msra.mxu0 %v730
    %748 = vmatpush.bf16.msra.mxu0 %v729
    %749 = vmatpush.bf16.msra.mxu0 %v728
    %750 = vmatpush.bf16.msra.mxu0 %v727
    %751 = vmatmul.bf16.gmra.mxu0 %v674
    %v752 = vpop.f32.mrf.mxu0
    %v753 = vadd.f32 %v693, %v752
    %v754 = vpop.f32.mrf.mxu0
    %v755 = vadd.f32 %v693, %v754
    %756 = vdwg.mxu0
    %v757 = vmax.f32 %v753, 0.0
    %v758 = vmax.f32 %v755, 0.0
    %v759 = vpack.c.bf16 %v758, %v757
    %v760 = vld [vmem:[#allocation6] sm:$0xf]
    %v761 = vld [vmem:[#allocation6 + $0x4] sm:$0xf]
    %v762 = vld [vmem:[#allocation6 + $0x8] sm:$0xf]
    %v763 = vld [vmem:[#allocation6 + $0xc] sm:$0xf]
    %v764 = vld [vmem:[#allocation6 + $0x10] sm:$0xf]
    %v765 = vld [vmem:[#allocation6 + $0x14] sm:$0xf]
    %v766 = vld [vmem:[#allocation6 + $0x18] sm:$0xf]
    %v767 = vld [vmem:[#allocation6 + $0x1c] sm:$0xf]
    %v768 = vld [vmem:[#allocation6 + $0x20] sm:$0xf]
    %v769 = vld [vmem:[#allocation6 + $0x24] sm:$0xf]
    %v770 = vld [vmem:[#allocation6 + $0x28] sm:$0xf]
    %v771 = vld [vmem:[#allocation6 + $0x2c] sm:$0xf]
    %v772 = vld [vmem:[#allocation6 + $0x30] sm:$0xf]
    %v773 = vld [vmem:[#allocation6 + $0x34] sm:$0xf]
    %v774 = vld [vmem:[#allocation6 + $0x38] sm:$0xf]
    %v775 = vld [vmem:[#allocation6 + $0x3c] sm:$0xf]
    %v776 = vld [vmem:[%s8] sm:$0x1]
    %v778 = vperm.slane %v776, 0
    %v796 = vunpack.c.l.b16 %v760
    %v797 = vunpack.c.l.b16 %v761
    %v798 = vunpack.c.l.b16 %v762
    %v799 = vunpack.c.l.b16 %v763
    %v800 = vunpack.c.l.b16 %v764
    %v801 = vunpack.c.l.b16 %v765
    %v802 = vunpack.c.l.b16 %v766
    %v803 = vunpack.c.l.b16 %v767
    %v804 = vunpack.c.l.b16 %v768
    %v805 = vunpack.c.l.b16 %v769
    %v806 = vunpack.c.l.b16 %v770
    %v807 = vunpack.c.l.b16 %v771
    %v808 = vunpack.c.l.b16 %v772
    %v809 = vunpack.c.l.b16 %v773
    %v810 = vunpack.c.l.b16 %v774
    %v811 = vunpack.c.l.b16 %v775
    %v812 = vpack.c.b16 %v797, %v796
    %v813 = vpack.c.b16 %v799, %v798
    %v814 = vpack.c.b16 %v801, %v800
    %v815 = vpack.c.b16 %v803, %v802
    %v816 = vpack.c.b16 %v805, %v804
    %v817 = vpack.c.b16 %v807, %v806
    %v818 = vpack.c.b16 %v809, %v808
    %v819 = vpack.c.b16 %v811, %v810
    %828 = vmatpush.bf16.msra.mxu0 %v819
    %829 = vmatpush.bf16.msra.mxu0 %v818
    %830 = vmatpush.bf16.msra.mxu0 %v817
    %831 = vmatpush.bf16.msra.mxu0 %v816
    %832 = vmatpush.bf16.msra.mxu0 %v815
    %833 = vmatpush.bf16.msra.mxu0 %v814
    %834 = vmatpush.bf16.msra.mxu0 %v813
    %835 = vmatpush.bf16.msra.mxu0 %v812
    %836 = vmatmul.bf16.gmra.mxu0 %v759
    %v837 = vpop.f32.mrf.mxu0
    %v838 = vadd.f32 %v778, %v837
    %v839 = vpop.f32.mrf.mxu0
    %v840 = vadd.f32 %v778, %v839
    %841 = vdwg.mxu0
    %v842 = vpack.c.bf16 %v838, %v838
    %v843 = vpack.c.bf16 %v840, %v840
    %844 = vst [vmem:[%s11] sm:$0xf] %v842
    %845 = vst [vmem:[%s11 + $0x4] sm:$0xf] %v843
    // Predicated region
    $region50: #{siamese_forward.1} parent=1 // pred_check
      _
    $region51: #{siamese_forward.1} parent=1 // pred_check_branch
      %847 = sbr.rel (0) target = $region53
    $region52: #{siamese_forward.1} parent=1 // pred_region
      _
    $region53: #{siamese_forward.1} parent=1 // pred_fallthru
      _
    // Predicated region
    $region54: #{siamese_forward.1} parent=1 // pred_check
      _
    $region55: #{siamese_forward.1} parent=1 // pred_check_branch
      %849 = sbr.rel (0) target = $region57
    $region56: #{siamese_forward.1} parent=1 // pred_region
      _
    $region57: #{siamese_forward.1} parent=1 // pred_fallthru
      _
    // Predicated region
    $region58: #{siamese_forward.1} parent=1 // pred_check
      _
    $region59: #{siamese_forward.1} parent=1 // pred_check_branch
      %851 = sbr.rel (0) target = $region61
    $region60: #{siamese_forward.1} parent=1 // pred_region
      _
    $region61: #{siamese_forward.1} parent=1 // pred_fallthru
      _
    // Predicated region
    $region62: #{siamese_forward.1} parent=1 // pred_check
      _
    $region63: #{siamese_forward.1} parent=1 // pred_check_branch
      %853 = sbr.rel (0) target = $region65
    $region64: #{siamese_forward.1} parent=1 // pred_region
      _
    $region65: #{siamese_forward.1} parent=1 // pred_fallthru
      _
    // Predicated region
    $region66: #{siamese_forward.1} parent=1 // pred_check
      _
    $region67: #{siamese_forward.1} parent=1 // pred_check_branch
      %855 = sbr.rel (0) target = $region69
    $region68: #{siamese_forward.1} parent=1 // pred_region
      _
    $region69: #{siamese_forward.1} parent=1 // pred_fallthru
      _
    // Predicated region
    $region70: #{siamese_forward.1} parent=1 // pred_check
      _
    $region71: #{siamese_forward.1} parent=1 // pred_check_branch
      %857 = sbr.rel (0) target = $region73
    $region72: #{siamese_forward.1} parent=1 // pred_region
      _
    $region73: #{siamese_forward.1} parent=1 // pred_fallthru
      _
    %858 = vsyncpa [#allocation3], 1
    %859 = vsyncpa [#allocation5], 1

</llo_original>
